<compile_context>
chip_gen: v6e
topology: v6e:2x2x1
jax: 0.10.0
libtpu: 0.0.40
codegen_flags: <defaults>
</compile_context>

<pallas_src>
import jax
import jax.numpy as jnp
from jax.experimental import pallas as pl
from jax.experimental.pallas import tpu as pltpu


def _linear_relu_kernel(x_ref, w_ref, b_ref, o_ref, acc_ref):
    # x_ref: (TB, TK) VMEM tile (native dtype); w_ref: (TK, 1) f32 VMEM;
    # b_ref: (1,) f32 SMEM; o_ref: (TB, 1) f32; acc_ref: (TB, 1) f32 scratch.
    k = pl.program_id(1)

    @pl.when(k == 0)
    def _():
        acc_ref[...] = jnp.zeros_like(acc_ref)

    x = x_ref[...].astype(jnp.float32)   # upcast after load (v5e VPU has no bf16)
    # N=1 matmul wastes MXU columns, but the MXU is otherwise dead and this keeps
    # the XLU (the previous small-D bottleneck) completely free.
    acc_ref[...] += jnp.dot(x, w_ref[...], preferred_element_type=jnp.float32)

    @pl.when(k == pl.num_programs(1) - 1)
    def _():
        y = acc_ref[...] + b_ref[0]
        o_ref[...] = jnp.maximum(y, 0.0).astype(o_ref.dtype)


def _round_up(n, m):
    return ((n + m - 1) // m) * m


def _choose_tiles(batch, feat, x_dtype_bytes,
                  *, vmem_budget_bytes=8 * 1024 * 1024, max_tile_rows=8192):
    """Pick (TB, TK): TB multiple of 16, double-buffered x tiles within budget.

    max_tile_rows stays at 8192 because the (TB, 1) output/accumulator buffers are
    lane-padded to 128 in VMEM (TB=8192 -> 4 MiB each); together with the x double
    buffer this keeps the worst case comfortably under the 32 MiB vmem limit.
    """
    # K tile: whole feature dim when modest, else 4096-lane chunks (multiple of 128).
    tk = feat if feat <= 4096 else 4096
    # Batch tile bound by the double-buffered x-tile budget (~1 MiB tiles at D=32).
    tb = vmem_budget_bytes // (2 * max(tk, 1) * max(x_dtype_bytes, 1))
    tb = max(16, min(max_tile_rows, (tb // 16) * 16))
    # Don't allocate blocks far beyond the actual batch.
    tb = min(tb, max(16, _round_up(batch, 16)))
    # Keep >= 2 batch grid steps for moderate batches so v7x's 2 TCs both get work.
    if batch > 32:
        tb = min(tb, max(16, _round_up(pl.cdiv(batch, 2), 16)))
    return tb, tk


def network1_forward(x, weight, bias):
    """x: (B, D); weight: (1, D) (PyTorch nn.Linear layout); bias: (1,)."""
    B, D = x.shape
    if x.dtype != jnp.float32 and x.dtype != jnp.bfloat16:
        x = x.astype(jnp.float32)            # stream f32/bf16 natively, else upcast once
    w = weight.astype(jnp.float32).reshape(D, 1)   # (D, 1) column for the in-kernel dot
    b = bias.astype(jnp.float32).reshape(1)

    tb, tk = _choose_tiles(B, D, jnp.dtype(x.dtype).itemsize)

    # Only when D is both huge (>4096) and not tk-aligned do we zero-pad the K axis
    # (zeros contribute nothing to the dot).  Never pad/copy along the batch axis.
    if D % tk != 0:
        d_pad = _round_up(D, tk) - D
        x = jnp.pad(x, ((0, 0), (0, d_pad)))
        w = jnp.pad(w, ((0, d_pad), (0, 0)))
    d_padded = x.shape[1]

    grid = (pl.cdiv(B, tb), d_padded // tk)

    out = pl.pallas_call(
        _linear_relu_kernel,
        out_shape=jax.ShapeDtypeStruct((B, 1), jnp.float32),
        grid_spec=pltpu.PrefetchScalarGridSpec(
            num_scalar_prefetch=0,
            grid=grid,
            in_specs=[
                pl.BlockSpec((tb, tk), lambda i, k: (i, k)),        # streamed x tiles
                pl.BlockSpec((tk, 1), lambda i, k: (k, 0)),         # tiny weight column
                pl.BlockSpec(memory_space=pltpu.MemorySpace.SMEM),  # scalar bias
            ],
            out_specs=pl.BlockSpec((tb, 1), lambda i, k: (i, 0)),   # resident over K
            scratch_shapes=[pltpu.VMEM((tb, 1), jnp.float32)],      # f32 accumulator
        ),
        compiler_params=pltpu.CompilerParams(
            dimension_semantics=("parallel", "arbitrary"),   # batch across TCs; K serial
            vmem_limit_bytes=32 * 1024 * 1024,               # safe on v7x's 64 MiB VMEM
        ),
    )(x, w, b)

    return out


def network1_reference(x, weight, bias):
    return jnp.maximum(x.astype(jnp.float32) @ weight.astype(jnp.float32).T
                       + bias.astype(jnp.float32), 0.0)


if __name__ == "__main__":
    key = jax.random.PRNGKey(0)
    batch, input_size = 8, 32

    kx, kw, kb = jax.random.split(key, 3)
    x = jax.random.normal(kx, (batch, input_size), dtype=jnp.float32)

    # Deterministic params mimicking nn.Linear's uniform(-1/sqrt(D), 1/sqrt(D)).
    bound = 1.0 / jnp.sqrt(jnp.float32(input_size))
    weight = jax.random.uniform(kw, (1, input_size), minval=-bound, maxval=bound,
                                dtype=jnp.float32)
    bias = jax.random.uniform(kb, (1,), minval=-bound, maxval=bound,
                              dtype=jnp.float32)

    out = jax.block_until_ready(network1_forward(x, weight, bias))
    ref = network1_reference(x, weight, bias)
    assert out.shape == (batch, 1), out.shape
    assert jnp.allclose(out, ref, atol=1e-5, rtol=1e-5), (out, ref)

    # Non-tile-aligned batch exercises the masked partial last block (no jnp.pad path).
    x2 = jax.random.normal(kx, (13, input_size), dtype=jnp.float32)
    out2 = jax.block_until_ready(network1_forward(x2, weight, bias))
    assert out2.shape == (13, 1)
    assert jnp.allclose(out2, network1_reference(x2, weight, bias),
                        atol=1e-5, rtol=1e-5)

    # bf16 input path (streamed natively, upcast in-kernel, f32 accumulate).
    x3 = x.astype(jnp.bfloat16)
    out3 = jax.block_until_ready(network1_forward(x3, weight, bias))
    assert out3.shape == (batch, 1)
    assert jnp.allclose(out3, network1_reference(x3, weight, bias),
                        atol=1e-2, rtol=1e-2)

    # TODO(synk): if D ever exceeds 4096 with a non-multiple-of-4096 value, the K-axis
    # zero-pad adds one extra HBM pass over x; acceptable for that edge case only.
    print("KERNEL_OK")
</pallas_src>

<mosaic_0001>
module attributes {stable_mosaic.version = 11 : i64} {
  func.func @_linear_relu_kernel(%arg0: i32, %arg1: i32, %arg2: memref<16x32xf32, #tpu.memory_space<vmem>>, %arg3: memref<32x1xf32, #tpu.memory_space<vmem>>, %arg4: memref<1xf32, #tpu.memory_space<smem>>, %arg5: memref<16x1xf32, #tpu.memory_space<vmem>>, %arg6: memref<16x1xf32, #tpu.memory_space<vmem>>) attributes {dimension_semantics = [#tpu.dimension_semantics<parallel>, #tpu.dimension_semantics<arbitrary>], iteration_bounds = array<i64: 1, 1>, scalar_prefetch = 0 : i64, scratch_operands = 1 : i64, tpu.core_type = #tpu.core_type<tc>, window_params = [{transform_indices = @transform_0, window_bounds = array<i64: 16, 32>}, {transform_indices = @transform_1, window_bounds = array<i64: 32, 1>}, {transform_indices = @transform_2, window_bounds = array<i64: 1>}, {transform_indices = @transform_3, window_bounds = array<i64: 16, 1>}]} {
    %c0_i32 = arith.constant 0 : i32
    %0 = arith.cmpi eq, %arg1, %c0_i32 : i32
    %1 = arith.extui %0 : i1 to i32
    %c0_i32_0 = arith.constant 0 : i32
    %2 = arith.cmpi ne, %1, %c0_i32_0 : i32
    scf.if %2 {
      %cst_10 = arith.constant 0.000000e+00 : f32
      %12 = vector.broadcast %cst_10 : f32 to vector<16x1xf32>
      %c0_11 = arith.constant 0 : index
      %c0_12 = arith.constant 0 : index
      %13 = vector.load %arg6[%c0_11, %c0_12] : memref<16x1xf32, #tpu.memory_space<vmem>>, vector<16x1xf32>
      tpu.vector_store %arg6[%c0_11, %c0_12], %12 {strides = array<i32>} : memref<16x1xf32, #tpu.memory_space<vmem>>, vector<16x1xf32>,
    } else {
    }
    %c0 = arith.constant 0 : index
    %c0_1 = arith.constant 0 : index
    %3 = vector.load %arg2[%c0, %c0_1] : memref<16x32xf32, #tpu.memory_space<vmem>>, vector<16x32xf32>
    %c0_2 = arith.constant 0 : index
    %c0_3 = arith.constant 0 : index
    %4 = vector.load %arg6[%c0_2, %c0_3] : memref<16x1xf32, #tpu.memory_space<vmem>>, vector<16x1xf32>
    %c0_4 = arith.constant 0 : index
    %c0_5 = arith.constant 0 : index
    %5 = vector.load %arg3[%c0_4, %c0_5] : memref<32x1xf32, #tpu.memory_space<vmem>>, vector<32x1xf32>
    %cst = arith.constant dense<0.000000e+00> : vector<16x1xf32>
    %6 = tpu.matmul %3, %5, %cst {dimension_numbers = #tpu.dot_dimension_numbers<[1], [0], [0], [1], [0, 0, 1, 1], [], []>} : vector<16x32xf32>, vector<32x1xf32>, vector<16x1xf32> -> vector<16x1xf32>
    %7 = arith.addf %4, %6 : vector<16x1xf32>
    %c0_6 = arith.constant 0 : index
    %c0_7 = arith.constant 0 : index
    %8 = vector.load %arg6[%c0_6, %c0_7] : memref<16x1xf32, #tpu.memory_space<vmem>>, vector<16x1xf32>
    tpu.vector_store %arg6[%c0_6, %c0_7], %7 {strides = array<i32>} : memref<16x1xf32, #tpu.memory_space<vmem>>, vector<16x1xf32>,
    %c0_i32_8 = arith.constant 0 : i32
    %9 = arith.cmpi eq, %arg1, %c0_i32_8 : i32
    %10 = arith.extui %9 : i1 to i32
    %c0_i32_9 = arith.constant 0 : i32
    %11 = arith.cmpi ne, %10, %c0_i32_9 : i32
    scf.if %11 {
      %c0_10 = arith.constant 0 : index
      %c0_11 = arith.constant 0 : index
      %12 = vector.load %arg6[%c0_10, %c0_11] : memref<16x1xf32, #tpu.memory_space<vmem>>, vector<16x1xf32>
      %c0_12 = arith.constant 0 : index
      %13 = memref.load %arg4[%c0_12] : memref<1xf32, #tpu.memory_space<smem>>
      %14 = vector.broadcast %13 : f32 to vector<16x1xf32>
      %15 = arith.addf %12, %14 : vector<16x1xf32>
      %cst_13 = arith.constant 0.000000e+00 : f32
      %16 = vector.broadcast %cst_13 : f32 to vector<16x1xf32>
      %17 = arith.maximumf %15, %16 : vector<16x1xf32>
      %c0_14 = arith.constant 0 : index
      %c0_15 = arith.constant 0 : index
      %18 = vector.load %arg5[%c0_14, %c0_15] : memref<16x1xf32, #tpu.memory_space<vmem>>, vector<16x1xf32>
      tpu.vector_store %arg5[%c0_14, %c0_15], %17 {strides = array<i32>} : memref<16x1xf32, #tpu.memory_space<vmem>>, vector<16x1xf32>,
    } else {
    }
    return
  }
  func.func @transform_0(%arg0: i32, %arg1: i32) -> (i32, i32) {
    %c0_i32 = arith.constant 0 : i32
    return %arg0, %arg1 : i32, i32
  }
  func.func @transform_1(%arg0: i32, %arg1: i32) -> (i32, i32) {
    %c0_i32 = arith.constant 0 : i32
    %c0_i32_0 = arith.constant 0 : i32
    return %arg1, %c0_i32 : i32, i32
  }
  func.func @transform_2(%arg0: i32, %arg1: i32) -> i32 {
    %c0_i32 = arith.constant 0 : i32
    %c0_i32_0 = arith.constant 0 : i32
    return %c0_i32 : i32
  }
  func.func @transform_3(%arg0: i32, %arg1: i32) -> (i32, i32) {
    %c0_i32 = arith.constant 0 : i32
    %c0_i32_0 = arith.constant 0 : i32
    return %arg0, %c0_i32 : i32, i32
  }
}

</mosaic_0001>

<llo_original>
// kernel: tpu_custom_call.1
$region0: #{tpu_custom_call.1}
  #allocation0 [shape = 'u32[]', space=smem, size = 0x4, offset = 0x4, fixed_abs, tag = 'smem constant byte address 0x4 - core index']
  #allocation1 [shape = 'u32[144,128]{1,0:T(1,128)}', space=vmem, size = 0x12000, scoped, tag = 'internal scratch']
  #allocation2 [shape = 'f32[16,1]{1,0:T(8,128)}', space=vmem, size = 0x2000, scoped, tag = 'scratch operand']
  #allocation3 [shape = 'f32[1]{0:T(128)S(6)}', space=smem, size = 0x200, scoped, tag = 'scoped memory for tpu_custom_call.1']
  %s0 = inlined_call_operand.vmem [shape: f32[8,32], index: 0, kind: input, shape index: {}]
  %s1 = inlined_call_operand.vmem [shape: f32[32,1], index: 1, kind: input, shape index: {}]
  %s2 = inlined_call_operand.<no memory space> [shape: f32[1], index: 2, kind: input, shape index: {}]
  %s3 = inlined_call_operand.vmem [shape: f32[8,1], index: 3, kind: output, shape index: {}]
  %s4 = sld [smem:[#allocation0]]
  $region64: #{tpu_custom_call.1} parent=0
    _
  %s6 = ssub.s32 1, %s4
  %s7 = scalar_select 0, %s6, %s4
  %8 = sst [smem:[#allocation3]] %s2
  $region1: #{tpu_custom_call.1} parent=0
    #allocation4 [shape = 'u8[8192]{0}', space=vmem, size = 0x2000, scoped, tag = 'output window, operand 0, single buffered']
    // Predicated region
    $region2: #{tpu_custom_call.1} parent=1 // pred_check
      _
    $region3: #{tpu_custom_call.1} parent=1 // pred_check_branch
      %10 = sbr.rel (0) target = $region5
    $region4: #{tpu_custom_call.1} parent=1 // pred_region
      _
    $region5: #{tpu_custom_call.1} parent=1 // pred_fallthru
      _
    // Predicated region
    $region6: #{tpu_custom_call.1} parent=1 // pred_check
      _
    $region7: #{tpu_custom_call.1} parent=1 // pred_check_branch
      %12 = sbr.rel (0) target = $region9
    $region8: #{tpu_custom_call.1} parent=1 // pred_region
      _
    $region9: #{tpu_custom_call.1} parent=1 // pred_fallthru
      _
    // Predicated region
    $region10: #{tpu_custom_call.1} parent=1 // pred_check
      _
    $region11: #{tpu_custom_call.1} parent=1 // pred_check_branch
      %14 = sbr.rel (0) target = $region13
    $region12: #{tpu_custom_call.1} parent=1 // pred_region
      _
    $region13: #{tpu_custom_call.1} parent=1 // pred_fallthru
      _
    %p15 = scmp.eq.s32.totalorder 0, 0
    // Predicated region
    $region14: #{tpu_custom_call.1} parent=1 // pred_check
      %p16 = pneg %p15
    $region15: #{tpu_custom_call.1} parent=1 // pred_check_branch
      %18 = sbr.rel (%p16) target = $region17
    $region16: #{tpu_custom_call.1} parent=1 // pred_region
      %vm19 = vcmask 7168
      %20 = vst.msk [vmem:[#allocation2] sm:$0xff] %vm19, 0.0
      %21 = vst.msk [vmem:[#allocation2 + $0x8] sm:$0xff] %vm19, 0.0
    $region17: #{tpu_custom_call.1} parent=1 // pred_fallthru
      _
    %v22 = vld [vmem:[%s0] sm:$0xff]
    %v23 = vld [vmem:[%s0 + $0x8] sm:$0xff]
    %v24 = vld [vmem:[#allocation2] sm:$0xff]
    %v25 = vld [vmem:[#allocation2 + $0x8] sm:$0xff]
    %v26 = vld [vmem:[%s1] sm:$0xff]
    %v27 = vld [vmem:[%s1 + $0x8] sm:$0xff]
    %v28 = vld [vmem:[%s1 + $0x10] sm:$0xff]
    %v29 = vld [vmem:[%s1 + $0x18] sm:$0xff]
    %vm30 = vcmask 261120
    %v32 = vsel %vm30, %v22, 0
    %v35 = vsel %vm30, %v23, 0
    %37 = vmatprep.subr.mxu0 0.0
    %38 = vmatpush1.msra.mxu0 0.0
    %39 = vmatprep.subr.mxu0 0.0
    %40 = vmatpush1.msra.mxu0 0.0
    %41 = vmatprep.subr.mxu0 0.0
    %42 = vmatpush1.msra.mxu0 0.0
    %43 = vmatprep.subr.mxu0 0.0
    %44 = vmatpush1.msra.mxu0 0.0
    %45 = vmatprep.subr.mxu0 0.0
    %46 = vmatpush1.msra.mxu0 0.0
    %47 = vmatprep.subr.mxu0 0.0
    %48 = vmatpush1.msra.mxu0 0.0
    %49 = vmatprep.subr.mxu0 0.0
    %50 = vmatpush1.msra.mxu0 0.0
    %51 = vmatprep.subr.mxu0 0.0
    %52 = vmatpush1.msra.mxu0 0.0
    %53 = vmatprep.subr.mxu0 0.0
    %54 = vmatpush1.msra.mxu0 0.0
    %55 = vmatprep.subr.mxu0 0.0
    %56 = vmatpush1.msra.mxu0 0.0
    %57 = vmatprep.subr.mxu0 0.0
    %58 = vmatpush1.msra.mxu0 0.0
    %59 = vmatprep.subr.mxu0 0.0
    %60 = vmatpush1.msra.mxu0 0.0
    %61 = vmatprep.subr.mxu0 0.0
    %62 = vmatpush1.msra.mxu0 %v29
    %63 = vmatprep.subr.mxu0 0.0
    %64 = vmatpush1.msra.mxu0 %v28
    %65 = vmatprep.subr.mxu0 0.0
    %66 = vmatpush1.msra.mxu0 %v27
    %67 = vmatprep.subr.mxu0 0.0
    %68 = vmatpush1.msra.mxu0 %v26
    %69 = vmatprep.subr.mxu0 0.0
    %70 = vmatpush2.msra.mxu0 0.0
    %71 = vmatprep.subr.mxu0 0.0
    %72 = vmatpush2.msra.mxu0 0.0
    %73 = vmatprep.subr.mxu0 0.0
    %74 = vmatpush2.msra.mxu0 0.0
    %75 = vmatprep.subr.mxu0 0.0
    %76 = vmatpush2.msra.mxu0 0.0
    %77 = vmatprep.subr.mxu0 0.0
    %78 = vmatpush2.msra.mxu0 0.0
    %79 = vmatprep.subr.mxu0 0.0
    %80 = vmatpush2.msra.mxu0 0.0
    %81 = vmatprep.subr.mxu0 0.0
    %82 = vmatpush2.msra.mxu0 0.0
    %83 = vmatprep.subr.mxu0 0.0
    %84 = vmatpush2.msra.mxu0 0.0
    %85 = vmatprep.subr.mxu0 0.0
    %86 = vmatpush2.msra.mxu0 0.0
    %87 = vmatprep.subr.mxu0 0.0
    %88 = vmatpush2.msra.mxu0 0.0
    %89 = vmatprep.subr.mxu0 0.0
    %90 = vmatpush2.msra.mxu0 0.0
    %91 = vmatprep.subr.mxu0 0.0
    %92 = vmatpush2.msra.mxu0 0.0
    %93 = vmatprep.subr.mxu0 0.0
    %94 = vmatpush2.msra.mxu0 0.0
    %95 = vmatprep.subr.mxu0 0.0
    %96 = vmatpush2.msra.mxu0 0.0
    %97 = vmatprep.subr.mxu0 0.0
    %98 = vmatpush2.msra.mxu0 0.0
    %99 = vmatprep.subr.mxu0 0.0
    %100 = vmatpush2.msra.mxu0 0.0
    %101 = vmatprep.mubr.f32.mxu0 0.0
    %102 = vmatmul.mubr.f32.gmra.mxu0 %v32
    %v103 = vpop.f32.mrf.mxu0
    %v104 = vadd.f32 0.0, %v103
    %v105 = vpop.f32.mrf.mxu0
    %106 = vmatprep.mubr.f32.mxu0 0.0
    %107 = vmatmul.mubr.f32.gmra.mxu0 %v35
    %v108 = vpop.f32.mrf.mxu0
    %v109 = vadd.f32 0.0, %v108
    %v110 = vpop.f32.mrf.mxu0
    %111 = vdwg.mxu0
    %v112 = vadd.f32 %v24, %v104
    %v113 = vadd.f32 %v25, %v109
    %vm114 = vcmask 7168
    %115 = vst.msk [vmem:[#allocation2] sm:$0xff] %vm114, %v112
    %116 = vst.msk [vmem:[#allocation2 + $0x8] sm:$0xff] %vm114, %v113
    // Predicated region
    $region18: #{tpu_custom_call.1} parent=1 // pred_check
      %p117 = pneg %p15
    $region19: #{tpu_custom_call.1} parent=1 // pred_check_branch
      %119 = sbr.rel (%p117) target = $region21
    $region20: #{tpu_custom_call.1} parent=1 // pred_region
      %v120 = vld [vmem:[#allocation2] sm:$0xff]
      %v121 = vld [vmem:[#allocation2 + $0x8] sm:$0xff]
      %s122 = sld [smem:[#allocation3]]
      %v123 = vstv %s122
      %v124 = vadd.f32 %v120, %v123
      %v125 = vadd.f32 %v121, %v123
      %v126 = vmax.f32 %v124, 0.0
      %v127 = vmax.f32 %v125, 0.0
      %128 = vst.msk [vmem:[#allocation4] sm:$0xff] %vm114, %v126
      %129 = vst.msk [vmem:[#allocation4 + $0x8] sm:$0xff] %vm114, %v127
    $region21: #{tpu_custom_call.1} parent=1 // pred_fallthru
      _
    // Predicated region
    $region22: #{tpu_custom_call.1} parent=1 // pred_check
      _
    $region23: #{tpu_custom_call.1} parent=1 // pred_check_branch
      %131 = sbr.rel (0) target = $region25
    $region24: #{tpu_custom_call.1} parent=1 // pred_region
      // Predicated region
      $region26: #{tpu_custom_call.1} parent=24 // pred_check
        _
      $region27: #{tpu_custom_call.1} parent=24 // pred_check_branch
        %133 = sbr.rel (0) target = $region29
      $region28: #{tpu_custom_call.1} parent=24 // pred_region
        // Predicated region
        $region30: #{tpu_custom_call.1} parent=28 // pred_check
          _
        $region31: #{tpu_custom_call.1} parent=28 // pred_check_branch
          %135 = sbr.rel (0) target = $region33
        $region32: #{tpu_custom_call.1} parent=28 // pred_region
          // Predicated region
          $region45: #{tpu_custom_call.1} parent=32 // pred_check
            _
          $region46: #{tpu_custom_call.1} parent=32 // pred_check_branch
            %151 = sbr.rel (0) target = $region48
          $region47: #{tpu_custom_call.1} parent=32 // pred_region
            loop: start=0, step=1, limit=1
            $region49: #{tpu_custom_call.1} parent=47 // loop_pre_header
              _
            $region50: #{tpu_custom_call.1} parent=47 // loop_header
              %s153 = sphi 0, %s157
              %p154 = scmp.ge.s32.totalorder %s153, 1
              %s158 = sphi [#allocation4], [#allocation4]
              %s159 = sphi %s3, %s3
            $region51: #{tpu_custom_call.1} parent=47 // loop_header_branch
              %156 = sbr.rel (%p154) target = $region55
            $region52: #{tpu_custom_call.1} parent=47 // loop_body
              %v160 = vld [vmem:[%s158] sm:$0xff]
              %161 = vst [vmem:[%s159] sm:$0xff] %v160
            $region53: #{tpu_custom_call.1} parent=47 // loop_footer
              %s157 = sadd.s32 1, %s153
            $region54: #{tpu_custom_call.1} parent=47 // loop_footer_branch
              %152 = sbr.rel target = $region50
            $region55: #{tpu_custom_call.1} parent=47 // loop_exit
              _
          $region48: #{tpu_custom_call.1} parent=32 // pred_fallthru
            _
          // Predicated region
          $region56: #{tpu_custom_call.1} parent=32 // pred_check
            _
          $region57: #{tpu_custom_call.1} parent=32 // pred_check_branch
            %163 = sbr.rel target = $region59
          $region58: #{tpu_custom_call.1} parent=32 // pred_region
            _
          $region59: #{tpu_custom_call.1} parent=32 // pred_fallthru
            _
        $region33: #{tpu_custom_call.1} parent=28 // pred_fallthru
          _
        // Predicated region
        $region34: #{tpu_custom_call.1} parent=28 // pred_check
          _
        $region35: #{tpu_custom_call.1} parent=28 // pred_check_branch
          %137 = sbr.rel target = $region37
        $region36: #{tpu_custom_call.1} parent=28 // pred_region
          %s139 = ssub.s32 256, 1
          loop: start=0, step=1, limit=1
          $region38: #{tpu_custom_call.1} parent=36 // loop_pre_header
            _
          $region39: #{tpu_custom_call.1} parent=36 // loop_header
            %s141 = sphi 0, %s145
            %p142 = scmp.ge.s32.totalorder %s141, 1
            %s146 = sphi [#allocation4], [#allocation4]
            %s147 = sphi %s3, %s3
          $region40: #{tpu_custom_call.1} parent=36 // loop_header_branch
            %144 = sbr.rel (%p142) target = $region44
          $region41: #{tpu_custom_call.1} parent=36 // loop_body
            %v148 = vld [vmem:[%s146] sm:%s139]
            %149 = vst [vmem:[%s147] sm:%s139] %v148
          $region42: #{tpu_custom_call.1} parent=36 // loop_footer
            %s145 = sadd.s32 1, %s141
          $region43: #{tpu_custom_call.1} parent=36 // loop_footer_branch
            %140 = sbr.rel target = $region39
          $region44: #{tpu_custom_call.1} parent=36 // loop_exit
            _
        $region37: #{tpu_custom_call.1} parent=28 // pred_fallthru
          _
      $region29: #{tpu_custom_call.1} parent=24 // pred_fallthru
        _
      %164 = vnop
    $region25: #{tpu_custom_call.1} parent=1 // pred_fallthru
      _
    // Predicated region
    $region60: #{tpu_custom_call.1} parent=1 // pred_check
      _
    $region61: #{tpu_custom_call.1} parent=1 // pred_check_branch
      %166 = sbr.rel (0) target = $region63
    $region62: #{tpu_custom_call.1} parent=1 // pred_region
      _
    $region63: #{tpu_custom_call.1} parent=1 // pred_fallthru
      _

</llo_original>
